<compile_context>
chip_gen: v6e
topology: v6e:2x2x1
jax: 0.10.0
libtpu: 0.0.40
codegen_flags: <defaults>
</compile_context>

<pallas_src>
import functools

import jax
import jax.numpy as jnp
import numpy as np
from jax.experimental import pallas as pl
from jax.experimental.pallas import tpu as pltpu


# ----------------------------------------------------------------------------
# Synthetic backbone config
# ----------------------------------------------------------------------------
CONV_COUT = 32
CONV_K = (3, 3, 3)
CONV_STRIDE = (2, 2, 2)
CONV_PAD = 1
FEAT_DIM = 128          # lane-dense output (multiple of 128)


# ----------------------------------------------------------------------------
# Fused Pallas kernel: conv matmul + bias + ReLU + GAP accumulate + FC
# ----------------------------------------------------------------------------
def _fused_conv_gap_fc_kernel(patches_ref, wc_ref, bc_ref, wf_ref, bf_ref,
                              out_ref, acc_ref, *, s_valid, tile_m, need_mask):
    # patches_ref: (1, tile_m, K) bf16   wc_ref: (K, Cout) bf16
    # bc_ref: (1, Cout) f32              wf_ref: (Cout, F) f32
    # bf_ref: (1, F) f32                 out_ref: (1, 1, F) f32
    # acc_ref: (1, Cout) f32 persistent VMEM scratch (GAP accumulator)
    j = pl.program_id(1)

    @pl.when(j == 0)
    def _init():
        acc_ref[...] = jnp.zeros_like(acc_ref)

    a = patches_ref[0]                                           # (tile_m, K)
    h = jnp.dot(a, wc_ref[...], preferred_element_type=jnp.float32)
    h = jnp.maximum(h + bc_ref[...], 0.0)                        # bias + ReLU (f32)

    if need_mask:
        # zero out padded rows so they do not pollute the GAP sum
        row = j * tile_m + jax.lax.broadcasted_iota(jnp.int32, h.shape, 0)
        h = jnp.where(row < s_valid, h, 0.0)

    acc_ref[...] += jnp.sum(h, axis=0, keepdims=True)            # (1, Cout)

    @pl.when(j == pl.num_programs(1) - 1)
    def _finalize():
        pooled = acc_ref[...] * (1.0 / float(s_valid))           # GAP (1, Cout)
        out_ref[0] = (jnp.dot(pooled, wf_ref[...],
                              preferred_element_type=jnp.float32)
                      + bf_ref[...])                             # (1, F)


def fused_conv_gap_fc(patches, w_conv, b_conv, w_fc, b_fc, *, tile_m_target=512):
    """patches: (N, S, K) bf16; returns (N, F) f32 features."""
    N, S, K = patches.shape
    Cout = w_conv.shape[1]
    F = w_fc.shape[1]

    tile_m = min(tile_m_target, S)
    tile_m = max(8, ((tile_m + 7) // 8) * 8)          # sublane-aligned
    num_tiles = (S + tile_m - 1) // tile_m
    S_pad = num_tiles * tile_m
    if S_pad != S:
        # tail-tile padding only; padded rows are masked inside the kernel
        patches = jnp.pad(patches, ((0, 0), (0, S_pad - S), (0, 0)))

    kernel = functools.partial(
        _fused_conv_gap_fc_kernel,
        s_valid=S, tile_m=tile_m, need_mask=(S_pad != S))

    out = pl.pallas_call(
        kernel,
        out_shape=jax.ShapeDtypeStruct((N, 1, F), jnp.float32),
        grid=(N, num_tiles),
        in_specs=[
            pl.BlockSpec((1, tile_m, K), lambda n, j: (n, j, 0)),
            pl.BlockSpec((K, Cout), lambda n, j: (0, 0)),
            pl.BlockSpec((1, Cout), lambda n, j: (0, 0)),
            pl.BlockSpec((Cout, F), lambda n, j: (0, 0)),
            pl.BlockSpec((1, F), lambda n, j: (0, 0)),
        ],
        out_specs=pl.BlockSpec((1, 1, F), lambda n, j: (n, 0, 0)),
        scratch_shapes=[pltpu.VMEM((1, Cout), jnp.float32)],
        compiler_params=pltpu.CompilerParams(
            dimension_semantics=("parallel", "arbitrary")),
    )(patches, w_conv, b_conv, w_fc, b_fc)
    return out[:, 0, :]


# ----------------------------------------------------------------------------
# Glue: im2col for the 3D conv (layout work, plain JAX)
# ----------------------------------------------------------------------------
def im2col_3d(x, kernel, stride, pad):
    """x: (N, C, D, H, W) -> patches (N, Do*Ho*Wo, C*kd*kh*kw), channel-major K."""
    N, C, D, H, W = x.shape
    kd, kh, kw = kernel
    sd, sh, sw = stride
    xp = jnp.pad(x, ((0, 0), (0, 0), (pad, pad), (pad, pad), (pad, pad)))
    Do = (D + 2 * pad - kd) // sd + 1
    Ho = (H + 2 * pad - kh) // sh + 1
    Wo = (W + 2 * pad - kw) // sw + 1

    cols = []
    for dz in range(kd):
        for dy in range(kh):
            for dx in range(kw):
                sl = xp[:, :,
                        dz:dz + (Do - 1) * sd + 1:sd,
                        dy:dy + (Ho - 1) * sh + 1:sh,
                        dx:dx + (Wo - 1) * sw + 1:sw]            # (N, C, Do, Ho, Wo)
                cols.append(jnp.transpose(sl, (0, 2, 3, 4, 1)))  # (N, Do, Ho, Wo, C)
    # last-two-axes flatten order = (c, tap) -> matches PyTorch Conv3d
    # weight.reshape(Cout, Cin*kd*kh*kw)
    patches = jnp.stack(cols, axis=-1)                           # (N,Do,Ho,Wo,C,27)
    patches = patches.reshape(N, Do * Ho * Wo, C * kd * kh * kw)
    return patches, (Do, Ho, Wo)


# ----------------------------------------------------------------------------
# Model
# ----------------------------------------------------------------------------
def init_params(cin, key=jax.random.PRNGKey(42)):
    k1, k2, k3, k4 = jax.random.split(key, 4)
    kd, kh, kw = CONV_K
    kfan = cin * kd * kh * kw
    return {
        # PyTorch Conv3d weight layout (Cout, Cin, kd, kh, kw)
        "conv_w": jax.random.normal(k1, (CONV_COUT, cin, kd, kh, kw),
                                    jnp.float32) * (1.0 / jnp.sqrt(kfan)),
        "conv_b": jax.random.normal(k2, (CONV_COUT,), jnp.float32) * 0.01,
        "fc_w": jax.random.normal(k3, (CONV_COUT, FEAT_DIM),
                                  jnp.float32) * (1.0 / jnp.sqrt(CONV_COUT)),
        "fc_b": jax.random.normal(k4, (FEAT_DIM,), jnp.float32) * 0.01,
    }


@jax.jit
def general_model_forward(action_frame, params):
    # ----- General_Model.forward glue (exact permute/view semantics) --------
    N, T, C, D, aH, aW = action_frame.shape
    x = jnp.transpose(action_frame, (0, 2, 1, 3, 4, 5))          # (N, C, T, D, H, W)
    x = x.reshape(N, C, T * D, aH, aW)                           # (N, C, T*D, H, W)

    # ----- backbone stem, fused into one Pallas kernel -----------------------
    # bf16 inputs (half HBM read traffic); f32 accumulate/bias/ReLU/GAP/FC.
    patches, _ = im2col_3d(x.astype(jnp.bfloat16), CONV_K, CONV_STRIDE, CONV_PAD)
    kd, kh, kw = CONV_K
    K = C * kd * kh * kw
    w_conv = params["conv_w"].reshape(CONV_COUT, K).T.astype(jnp.bfloat16)  # (K, Cout)
    b_conv = params["conv_b"].reshape(1, CONV_COUT).astype(jnp.float32)
    w_fc = params["fc_w"].astype(jnp.float32)                               # (Cout, F)
    b_fc = params["fc_b"].reshape(1, FEAT_DIM).astype(jnp.float32)

    general_feature = fused_conv_gap_fc(patches, w_conv, b_conv, w_fc, b_fc)
    return general_feature                                       # (N, FEAT_DIM)


@jax.jit
def reference_forward(action_frame, params):
    """Pure-jnp reference with identical bf16 inputs / f32 accumulation."""
    N, T, C, D, aH, aW = action_frame.shape
    x = jnp.transpose(action_frame, (0, 2, 1, 3, 4, 5)).reshape(N, C, T * D, aH, aW)
    patches, _ = im2col_3d(x.astype(jnp.bfloat16), CONV_K, CONV_STRIDE, CONV_PAD)
    kd, kh, kw = CONV_K
    K = C * kd * kh * kw
    w_conv = params["conv_w"].reshape(CONV_COUT, K).T.astype(jnp.bfloat16)
    h = jnp.einsum("nsk,kc->nsc", patches, w_conv,
                   preferred_element_type=jnp.float32)
    h = jnp.maximum(h + params["conv_b"].reshape(1, 1, CONV_COUT), 0.0)
    pooled = jnp.mean(h, axis=1)                                 # (N, Cout)
    return pooled @ params["fc_w"] + params["fc_b"].reshape(1, FEAT_DIM)


# ----------------------------------------------------------------------------
if __name__ == "__main__":
    # action_frame: (N, T, C, D, aH, aW)
    N, T, C, D, aH, aW = 2, 2, 3, 4, 16, 16
    key = jax.random.PRNGKey(0)
    action_frame = jax.random.normal(key, (N, T, C, D, aH, aW), jnp.float32)

    params = init_params(C)
    feat = general_model_forward(action_frame, params)
    jax.block_until_ready(feat)
    assert feat.shape == (N, FEAT_DIM), feat.shape

    ref = reference_forward(action_frame, params)
    jax.block_until_ready(ref)
    np.testing.assert_allclose(np.asarray(feat), np.asarray(ref),
                               rtol=2e-2, atol=2e-2)
    print("KERNEL_OK")
</pallas_src>

<mosaic_0001>
module attributes {stable_mosaic.version = 11 : i64} {
  func.func @_fused_conv_gap_fc_kernel(%arg0: i32, %arg1: i32, %arg2: memref<1x256x81xbf16, #tpu.memory_space<vmem>>, %arg3: memref<81x32xbf16, #tpu.memory_space<vmem>>, %arg4: memref<1x32xf32, #tpu.memory_space<vmem>>, %arg5: memref<32x128xf32, #tpu.memory_space<vmem>>, %arg6: memref<1x128xf32, #tpu.memory_space<vmem>>, %arg7: memref<1x1x128xf32, #tpu.memory_space<vmem>>, %arg8: memref<1x32xf32, #tpu.memory_space<vmem>>) attributes {dimension_semantics = [#tpu.dimension_semantics<parallel>, #tpu.dimension_semantics<arbitrary>], iteration_bounds = array<i64: 2, 1>, scalar_prefetch = 0 : i64, scratch_operands = 1 : i64, tpu.core_type = #tpu.core_type<tc>, window_params = [{transform_indices = @transform_0, window_bounds = array<i64: 1, 256, 81>}, {pipeline_mode = #tpu.pipeline_mode<synchronous>, transform_indices = @transform_1, window_bounds = array<i64: 81, 32>}, {pipeline_mode = #tpu.pipeline_mode<synchronous>, transform_indices = @transform_2, window_bounds = array<i64: 1, 32>}, {pipeline_mode = #tpu.pipeline_mode<synchronous>, transform_indices = @transform_3, window_bounds = array<i64: 32, 128>}, {pipeline_mode = #tpu.pipeline_mode<synchronous>, transform_indices = @transform_4, window_bounds = array<i64: 1, 128>}, {transform_indices = @transform_5, window_bounds = array<i64: 1, 1, 128>}]} {
    %c0_i32 = arith.constant 0 : i32
    %0 = arith.cmpi eq, %arg1, %c0_i32 : i32
    %1 = arith.extui %0 : i1 to i32
    %c0_i32_0 = arith.constant 0 : i32
    %2 = arith.cmpi ne, %1, %c0_i32_0 : i32
    scf.if %2 {
      %cst_15 = arith.constant 0.000000e+00 : f32
      %20 = vector.broadcast %cst_15 : f32 to vector<1x32xf32>
      %c0_16 = arith.constant 0 : index
      %c0_17 = arith.constant 0 : index
      %21 = vector.load %arg8[%c0_16, %c0_17] : memref<1x32xf32, #tpu.memory_space<vmem>>, vector<1x32xf32>
      tpu.vector_store %arg8[%c0_16, %c0_17], %20 {strides = array<i32>} : memref<1x32xf32, #tpu.memory_space<vmem>>, vector<1x32xf32>,
    } else {
    }
    %c0 = arith.constant 0 : index
    %c0_1 = arith.constant 0 : index
    %c0_2 = arith.constant 0 : index
    %3 = vector.load %arg2[%c0, %c0_1, %c0_2] : memref<1x256x81xbf16, #tpu.memory_space<vmem>>, vector<1x256x81xbf16>
    %4 = vector.shape_cast %3 : vector<1x256x81xbf16> to vector<256x81xbf16>
    %c0_3 = arith.constant 0 : index
    %c0_4 = arith.constant 0 : index
    %5 = vector.load %arg3[%c0_3, %c0_4] : memref<81x32xbf16, #tpu.memory_space<vmem>>, vector<81x32xbf16>
    %cst = arith.constant dense<0.000000e+00> : vector<256x32xf32>
    %6 = tpu.matmul %4, %5, %cst {dimension_numbers = #tpu.dot_dimension_numbers<[1], [0], [0], [1], [0, 0, 1, 1], [], []>} : vector<256x81xbf16>, vector<81x32xbf16>, vector<256x32xf32> -> vector<256x32xf32>
    %c0_5 = arith.constant 0 : index
    %c0_6 = arith.constant 0 : index
    %7 = vector.load %arg4[%c0_5, %c0_6] : memref<1x32xf32, #tpu.memory_space<vmem>>, vector<1x32xf32>
    %8 = vector.broadcast %7 : vector<1x32xf32> to vector<256x32xf32>
    %9 = arith.addf %6, %8 : vector<256x32xf32>
    %cst_7 = arith.constant 0.000000e+00 : f32
    %10 = vector.broadcast %cst_7 : f32 to vector<256x32xf32>
    %11 = arith.maximumf %9, %10 : vector<256x32xf32>
    %c0_8 = arith.constant 0 : index
    %c0_9 = arith.constant 0 : index
    %12 = vector.load %arg8[%c0_8, %c0_9] : memref<1x32xf32, #tpu.memory_space<vmem>>, vector<1x32xf32>
    %cst_10 = arith.constant dense<0.000000e+00> : vector<32xf32>
    %13 = vector.multi_reduction <add>, %11, %cst_10 [0] : vector<256x32xf32> to vector<32xf32>
    %14 = vector.shape_cast %13 : vector<32xf32> to vector<1x32xf32>
    %15 = arith.addf %12, %14 : vector<1x32xf32>
    %c0_11 = arith.constant 0 : index
    %c0_12 = arith.constant 0 : index
    %16 = vector.load %arg8[%c0_11, %c0_12] : memref<1x32xf32, #tpu.memory_space<vmem>>, vector<1x32xf32>
    tpu.vector_store %arg8[%c0_11, %c0_12], %15 {strides = array<i32>} : memref<1x32xf32, #tpu.memory_space<vmem>>, vector<1x32xf32>,
    %c0_i32_13 = arith.constant 0 : i32
    %17 = arith.cmpi eq, %arg1, %c0_i32_13 : i32
    %18 = arith.extui %17 : i1 to i32
    %c0_i32_14 = arith.constant 0 : i32
    %19 = arith.cmpi ne, %18, %c0_i32_14 : i32
    scf.if %19 {
      %c0_15 = arith.constant 0 : index
      %c0_16 = arith.constant 0 : index
      %20 = vector.load %arg8[%c0_15, %c0_16] : memref<1x32xf32, #tpu.memory_space<vmem>>, vector<1x32xf32>
      %cst_17 = arith.constant 3.906250e-03 : f32
      %21 = vector.broadcast %cst_17 : f32 to vector<1x32xf32>
      %22 = arith.mulf %20, %21 : vector<1x32xf32>
      %c0_18 = arith.constant 0 : index
      %c0_19 = arith.constant 0 : index
      %23 = vector.load %arg5[%c0_18, %c0_19] : memref<32x128xf32, #tpu.memory_space<vmem>>, vector<32x128xf32>
      %cst_20 = arith.constant dense<0.000000e+00> : vector<1x128xf32>
      %24 = tpu.matmul %22, %23, %cst_20 {dimension_numbers = #tpu.dot_dimension_numbers<[1], [0], [0], [1], [0, 0, 1, 1], [], []>} : vector<1x32xf32>, vector<32x128xf32>, vector<1x128xf32> -> vector<1x128xf32>
      %c0_21 = arith.constant 0 : index
      %c0_22 = arith.constant 0 : index
      %25 = vector.load %arg6[%c0_21, %c0_22] : memref<1x128xf32, #tpu.memory_space<vmem>>, vector<1x128xf32>
      %26 = arith.addf %24, %25 : vector<1x128xf32>
      %c0_23 = arith.constant 0 : index
      %c0_24 = arith.constant 0 : index
      %c0_25 = arith.constant 0 : index
      %27 = vector.load %arg7[%c0_23, %c0_24, %c0_25] : memref<1x1x128xf32, #tpu.memory_space<vmem>>, vector<1x1x128xf32>
      %28 = vector.shape_cast %27 : vector<1x1x128xf32> to vector<1x128xf32>
      %29 = vector.shape_cast %26 : vector<1x128xf32> to vector<1x1x128xf32>
      tpu.vector_store %arg7[%c0_23, %c0_24, %c0_25], %29 {strides = array<i32>} : memref<1x1x128xf32, #tpu.memory_space<vmem>>, vector<1x1x128xf32>,
    } else {
    }
    return
  }
  func.func @transform_0(%arg0: i32, %arg1: i32) -> (i32, i32, i32) {
    %c0_i32 = arith.constant 0 : i32
    %c0_i32_0 = arith.constant 0 : i32
    return %arg0, %arg1, %c0_i32 : i32, i32, i32
  }
  func.func @transform_1(%arg0: i32, %arg1: i32) -> (i32, i32) {
    %c0_i32 = arith.constant 0 : i32
    %c0_i32_0 = arith.constant 0 : i32
    %c0_i32_1 = arith.constant 0 : i32
    return %c0_i32, %c0_i32_0 : i32, i32
  }
  func.func @transform_2(%arg0: i32, %arg1: i32) -> (i32, i32) {
    %c0_i32 = arith.constant 0 : i32
    %c0_i32_0 = arith.constant 0 : i32
    %c0_i32_1 = arith.constant 0 : i32
    return %c0_i32, %c0_i32_0 : i32, i32
  }
  func.func @transform_3(%arg0: i32, %arg1: i32) -> (i32, i32) {
    %c0_i32 = arith.constant 0 : i32
    %c0_i32_0 = arith.constant 0 : i32
    %c0_i32_1 = arith.constant 0 : i32
    return %c0_i32, %c0_i32_0 : i32, i32
  }
  func.func @transform_4(%arg0: i32, %arg1: i32) -> (i32, i32) {
    %c0_i32 = arith.constant 0 : i32
    %c0_i32_0 = arith.constant 0 : i32
    %c0_i32_1 = arith.constant 0 : i32
    return %c0_i32, %c0_i32_0 : i32, i32
  }
  func.func @transform_5(%arg0: i32, %arg1: i32) -> (i32, i32, i32) {
    %c0_i32 = arith.constant 0 : i32
    %c0_i32_0 = arith.constant 0 : i32
    %c0_i32_1 = arith.constant 0 : i32
    return %arg0, %c0_i32, %c0_i32_0 : i32, i32, i32
  }
}

</mosaic_0001>

<llo_original>
// kernel: general_model_forward.1
$region0: #{general_model_forward.1}
  #allocation0 [shape = 'u32[]', space=smem, size = 0x4, offset = 0x4, fixed_abs, tag = 'smem constant byte address 0x4 - core index']
  #allocation1 [shape = 'u32[144,128]{1,0:T(1,128)}', space=vmem, size = 0x12000, scoped, tag = 'internal scratch']
  #allocation2 [shape = 'f32[1,32]{1,0:T(1,128)}', space=vmem, size = 0x200, scoped, tag = 'scratch operand']
  %s0 = inlined_call_operand.vmem [shape: bf16[2,256,81], index: 0, kind: input, shape index: {}]
  %s1 = inlined_call_operand.vmem [shape: bf16[81,32], index: 1, kind: input, shape index: {}]
  %s2 = inlined_call_operand.vmem [shape: f32[1,32], index: 2, kind: input, shape index: {}]
  %s3 = inlined_call_operand.vmem [shape: f32[32,128], index: 3, kind: input, shape index: {}]
  %s4 = inlined_call_operand.vmem [shape: f32[1,128], index: 4, kind: input, shape index: {}]
  %s5 = inlined_call_operand.hbm [shape: f32[2,1,128], index: 5, kind: output, shape index: {}]
  %s6 = sld [smem:[#allocation0]]
  $region61: #{general_model_forward.1} parent=0
    _
  %s8 = ssub.s32 1, %s6
  %s9 = scalar_select 0, %s8, %s6
  $region1: #{general_model_forward.1} parent=0
    #allocation3 [shape = 'u8[1024]{0}', space=vmem, size = 0x400, scoped, tag = 'output window, operand 0']
    #allocation4 [shape = 's32[2]{0}', space=sflag, size = 0x8, scoped, tag = 'scoped memory for general_model_forward.1']
    %10 = vsyncpa [#allocation4], 0
    %s11 = scalar_lea.sflag [#allocation4], 1
    %12 = vsyncpa %s11, 0
    loop: start=0, step=1, limit=4
    $region2: #{general_model_forward.1} parent=1 // loop_pre_header
      _
    $region3: #{general_model_forward.1} parent=1 // loop_header
      %s14 = sphi 0, %s18
      %p15 = scmp.ge.s32.totalorder %s14, 4
      %s21 = sphi 0, %s33
      %s22 = sphi 0, %s29
      %s23 = sphi 0, %s21
      %s24 = sphi 0, %s22
      %s25 = sphi 0, %s23
      %s26 = sphi 0, %s24
      %s38 = sphi 0, %s40
      %s41 = sphi 0, %s38
      %s42 = sphi 0, %s41
      %s58 = sphi 0, %s42
      %s62 = sphi 0, %s62
      %s64 = sphi 0, %s62
      %s65 = sphi 0, %s64
      %s79 = sphi 0, %s65
      %s83 = sphi 0, %s83
      %s85 = sphi 0, %s83
      %s86 = sphi 0, %s85
      %s100 = sphi 0, %s86
      %s104 = sphi 0, %s104
      %s106 = sphi 0, %s104
      %s107 = sphi 0, %s106
      %s121 = sphi 0, %s107
      %s125 = sphi 0, %s125
      %s127 = sphi 0, %s125
      %s128 = sphi 0, %s127
      %s142 = sphi 0, %s128
      %s148 = sphi 0, %s150
      %s151 = sphi 0, %s148
      %s152 = sphi 0, %s151
      %s168 = sphi 0, %s152
    $region4: #{general_model_forward.1} parent=1 // loop_header_branch
      %17 = sbr.rel (%p15) target = $region8
    $region5: #{general_model_forward.1} parent=1 // loop_body
      %s19 = ssub.s32 %s14, 1
      %s20 = ssub.s32 %s14, 2
      %s27 = sadd.s32 1, %s22
      %p28 = scmp.ge.s32.totalorder %s27, 1
      %s29 = scalar_select %p28, 0, %s27
      %s30 = sadd.s32 1, %s21
      %s31 = scalar_select %p28, %s30, %s21
      %p32 = scmp.ge.s32.totalorder %s31, 2
      %s33 = scalar_select %p32, 0, %s31
      %s34 = ssub.s32 %s21, %s33
      %s35 = ssub.s32 %s22, %s29
      %s36 = sor.u32 %s34, %s35
      %p37 = scmp.eq.s32.totalorder %s36, 0
      %s39 = sadd.s32 %s38, 1
      %s40 = scalar_select %p37, %s38, %s39
      %p43 = pneg %p37
      %p44 = scmp.eq.s32.totalorder %s14, 1
      %p45 = por %p43, %p44
      %p46 = scmp.ne.s32.totalorder %s38, %s41
      %p47 = scmp.eq.s32.totalorder %s14, 0
      %p48 = por %p46, %p47
      %p49 = scmp.ne.s32.totalorder %s38, %s41
      %p50 = scmp.eq.s32.totalorder %s19, 1
      %p51 = por %p49, %p50
      %p52 = scmp.ne.s32.totalorder %s41, %s42
      %p53 = scmp.eq.s32.totalorder %s19, 0
      %p54 = por %p52, %p53
      %p55 = scmp.ne.s32.totalorder %s41, %s42
      %p56 = scmp.eq.s32.totalorder %s20, 1
      %p57 = por %p55, %p56
      %p59 = scmp.ne.s32.totalorder %s42, %s58
      %p60 = scmp.eq.s32.totalorder %s20, 0
      %p61 = por %p59, %p60
      %s63 = sadd.s32 %s62, 1
      %p66 = scmp.eq.s32.totalorder %s14, 1
      %p67 = scmp.ne.s32.totalorder %s62, %s64
      %p68 = scmp.eq.s32.totalorder %s14, 0
      %p69 = por %p67, %p68
      %p70 = scmp.ne.s32.totalorder %s62, %s64
      %p71 = scmp.eq.s32.totalorder %s19, 1
      %p72 = por %p70, %p71
      %p73 = scmp.ne.s32.totalorder %s64, %s65
      %p74 = scmp.eq.s32.totalorder %s19, 0
      %p75 = por %p73, %p74
      %p76 = scmp.ne.s32.totalorder %s64, %s65
      %p77 = scmp.eq.s32.totalorder %s20, 1
      %p78 = por %p76, %p77
      %p80 = scmp.ne.s32.totalorder %s65, %s79
      %p81 = scmp.eq.s32.totalorder %s20, 0
      %p82 = por %p80, %p81
      %s84 = sadd.s32 %s83, 1
      %p87 = scmp.eq.s32.totalorder %s14, 1
      %p88 = scmp.ne.s32.totalorder %s83, %s85
      %p89 = scmp.eq.s32.totalorder %s14, 0
      %p90 = por %p88, %p89
      %p91 = scmp.ne.s32.totalorder %s83, %s85
      %p92 = scmp.eq.s32.totalorder %s19, 1
      %p93 = por %p91, %p92
      %p94 = scmp.ne.s32.totalorder %s85, %s86
      %p95 = scmp.eq.s32.totalorder %s19, 0
      %p96 = por %p94, %p95
      %p97 = scmp.ne.s32.totalorder %s85, %s86
      %p98 = scmp.eq.s32.totalorder %s20, 1
      %p99 = por %p97, %p98
      %p101 = scmp.ne.s32.totalorder %s86, %s100
      %p102 = scmp.eq.s32.totalorder %s20, 0
      %p103 = por %p101, %p102
      %s105 = sadd.s32 %s104, 1
      %p108 = scmp.eq.s32.totalorder %s14, 1
      %p109 = scmp.ne.s32.totalorder %s104, %s106
      %p110 = scmp.eq.s32.totalorder %s14, 0
      %p111 = por %p109, %p110
      %p112 = scmp.ne.s32.totalorder %s104, %s106
      %p113 = scmp.eq.s32.totalorder %s19, 1
      %p114 = por %p112, %p113
      %p115 = scmp.ne.s32.totalorder %s106, %s107
      %p116 = scmp.eq.s32.totalorder %s19, 0
      %p117 = por %p115, %p116
      %p118 = scmp.ne.s32.totalorder %s106, %s107
      %p119 = scmp.eq.s32.totalorder %s20, 1
      %p120 = por %p118, %p119
      %p122 = scmp.ne.s32.totalorder %s107, %s121
      %p123 = scmp.eq.s32.totalorder %s20, 0
      %p124 = por %p122, %p123
      %s126 = sadd.s32 %s125, 1
      %p129 = scmp.eq.s32.totalorder %s14, 1
      %p130 = scmp.ne.s32.totalorder %s125, %s127
      %p131 = scmp.eq.s32.totalorder %s14, 0
      %p132 = por %p130, %p131
      %p133 = scmp.ne.s32.totalorder %s125, %s127
      %p134 = scmp.eq.s32.totalorder %s19, 1
      %p135 = por %p133, %p134
      %p136 = scmp.ne.s32.totalorder %s127, %s128
      %p137 = scmp.eq.s32.totalorder %s19, 0
      %p138 = por %p136, %p137
      %p139 = scmp.ne.s32.totalorder %s127, %s128
      %p140 = scmp.eq.s32.totalorder %s20, 1
      %p141 = por %p139, %p140
      %p143 = scmp.ne.s32.totalorder %s128, %s142
      %p144 = scmp.eq.s32.totalorder %s20, 0
      %p145 = por %p143, %p144
      %s146 = ssub.s32 %s21, %s33
      %p147 = scmp.eq.s32.totalorder %s146, 0
      %s149 = sadd.s32 %s148, 1
      %s150 = scalar_select %p147, %s148, %s149
      %p153 = pneg %p147
      %p154 = scmp.eq.s32.totalorder %s14, 1
      %p155 = por %p153, %p154
      %p156 = scmp.ne.s32.totalorder %s148, %s151
      %p157 = scmp.eq.s32.totalorder %s14, 0
      %p158 = por %p156, %p157
      %p159 = scmp.ne.s32.totalorder %s148, %s151
      %p160 = scmp.eq.s32.totalorder %s19, 1
      %p161 = por %p159, %p160
      %p162 = scmp.ne.s32.totalorder %s151, %s152
      %p163 = scmp.eq.s32.totalorder %s19, 0
      %p164 = por %p162, %p163
      %p165 = scmp.ne.s32.totalorder %s151, %s152
      %p166 = scmp.eq.s32.totalorder %s20, 1
      %p167 = por %p165, %p166
      %p169 = scmp.ne.s32.totalorder %s152, %s168
      %p170 = scmp.eq.s32.totalorder %s20, 0
      %p171 = por %p169, %p170
      %p172 = scmp.le.s32.totalorder 1, %s14
      %p173 = scmp.lt.s32.totalorder %s14, 3
      %p174 = pnand %p172, %p173
      %p175 = pneg %p174
      // Predicated region
      $region9: #{general_model_forward.1} parent=5 // pred_check
        _
      $region10: #{general_model_forward.1} parent=5 // pred_check_branch
        %177 = sbr.rel (%p174) target = $region12
      $region11: #{general_model_forward.1} parent=5 // pred_region
        %s178 = ssub.s32 %s14, 1
        // Predicated region
        $region13: #{general_model_forward.1} parent=11 // pred_check
          %p179 = pneg %p75
        $region14: #{general_model_forward.1} parent=11 // pred_check_branch
          %181 = sbr.rel (%p179) target = $region16
        $region15: #{general_model_forward.1} parent=11 // pred_region
          _
        $region16: #{general_model_forward.1} parent=11 // pred_fallthru
          _
        // Predicated region
        $region17: #{general_model_forward.1} parent=11 // pred_check
          %p182 = pneg %p96
        $region18: #{general_model_forward.1} parent=11 // pred_check_branch
          %184 = sbr.rel (%p182) target = $region20
        $region19: #{general_model_forward.1} parent=11 // pred_region
          _
        $region20: #{general_model_forward.1} parent=11 // pred_fallthru
          _
        // Predicated region
        $region21: #{general_model_forward.1} parent=11 // pred_check
          %p185 = pneg %p117
        $region22: #{general_model_forward.1} parent=11 // pred_check_branch
          %187 = sbr.rel (%p185) target = $region24
        $region23: #{general_model_forward.1} parent=11 // pred_region
          _
        $region24: #{general_model_forward.1} parent=11 // pred_fallthru
          _
        // Predicated region
        $region25: #{general_model_forward.1} parent=11 // pred_check
          %p188 = pneg %p138
        $region26: #{general_model_forward.1} parent=11 // pred_check_branch
          %190 = sbr.rel (%p188) target = $region28
        $region27: #{general_model_forward.1} parent=11 // pred_region
          _
        $region28: #{general_model_forward.1} parent=11 // pred_fallthru
          _
      $region12: #{general_model_forward.1} parent=5 // pred_fallthru
        _
      %p191 = scmp.lt.s32.totalorder %s14, 2
      // Predicated region
      $region29: #{general_model_forward.1} parent=5 // pred_check
        %p192 = pneg %p191
      $region30: #{general_model_forward.1} parent=5 // pred_check_branch
        %194 = sbr.rel (%p192) target = $region32
      $region31: #{general_model_forward.1} parent=5 // pred_region
        // Predicated region
        $region33: #{general_model_forward.1} parent=31 // pred_check
          %p195 = pneg %p48
        $region34: #{general_model_forward.1} parent=31 // pred_check_branch
          %197 = sbr.rel (%p195) target = $region36
        $region35: #{general_model_forward.1} parent=31 // pred_region
          %s198 = smul.u32 32, %s22
          %p199 = scmp.lt.s32.totalorder %s21, 1
          %s200 = scalar_select %p199, %s21, 1
          %p201 = scmp.lt.s32.totalorder %s198, 31
          %s202 = scalar_select %p201, %s198, 31
          %s203 = smul.addr %s200, 32
          %s204 = sadd.s32 %s202, %s203
          %s205 = smul.addr %s204, 4
          %s206 = scalar_lea.vmem %s0, %s205
          %s207 = smul.u32 32, %s22
        $region36: #{general_model_forward.1} parent=31 // pred_fallthru
          _
      $region32: #{general_model_forward.1} parent=5 // pred_fallthru
        _
      %p208 = scmp.le.s32.totalorder 1, %s14
      %p209 = scmp.lt.s32.totalorder %s14, 3
      %p210 = pnand %p208, %p209
      %p211 = pneg %p210
      // Predicated region
      $region37: #{general_model_forward.1} parent=5 // pred_check
        _
      $region38: #{general_model_forward.1} parent=5 // pred_check_branch
        %213 = sbr.rel (%p210) target = $region40
      $region39: #{general_model_forward.1} parent=5 // pred_region
        %s214 = ssub.s32 %s14, 1
        %s215 = smul.u32 32, %s24
        %p216 = scmp.lt.s32.totalorder %s23, 1
        %s217 = scalar_select %p216, %s23, 1
        %p218 = scmp.lt.s32.totalorder %s215, 31
        %s219 = scalar_select %p218, %s215, 31
        %s220 = smul.addr %s217, 32
        %s221 = sadd.s32 %s219, %s220
        %s222 = smul.addr %s221, 4
        %s223 = scalar_lea.vmem %s0, %s222
        %p224 = pneg %p54
        %p225 = pneg %p51
        %p226 = pneg %p75
        %p227 = pneg %p72
        %p228 = pneg %p96
        %p229 = pneg %p93
        %p230 = pneg %p117
        %p231 = pneg %p114
        %p232 = pneg %p138
        %p233 = pneg %p135
        %p234 = pneg %p164
        %p235 = pneg %p161
        %s236 = sand.u32 %s151, 1
        %s237 = scalar_lea.sflag [#allocation4], %s236
        %s238 = sand.u32 %s151, 1
        %s239 = scalar_lea.vmem [#allocation3], %s238
        %s240 = smul.u32 32, %s24
        %p241 = scmp.lt.s32.totalorder %s23, 1
        %s242 = scalar_select %p241, %s23, 1
        %p243 = scmp.lt.s32.totalorder %s240, 31
        %s244 = scalar_select %p243, %s240, 31
        %s245 = smul.addr %s242, 32
        %s246 = sadd.s32 %s244, %s245
        %s247 = smul.addr %s246, 4
        %s248 = scalar_lea.vmem %s0, %s247
        %s249 = smul.u32 32, %s24
        %p251 = scmp.eq.s32.totalorder %s24, 0
        // Predicated region
        $region41: #{general_model_forward.1} parent=39 // pred_check
          %p252 = pneg %p251
        $region42: #{general_model_forward.1} parent=39 // pred_check_branch
          %254 = sbr.rel (%p252) target = $region44
        $region43: #{general_model_forward.1} parent=39 // pred_region
          %vm255 = vcmask 253952
          %256 = vst.msk [vmem:[#allocation2] sm:$0x1] %vm255, 0.0
        $region44: #{general_model_forward.1} parent=39 // pred_fallthru
          _
        %v257 = vld [vmem:[%s248] sm:$0xf]
        %v258 = vld [vmem:[%s248 + $0x4] sm:$0xf]
        %v259 = vld [vmem:[%s248 + $0x8] sm:$0xf]
        %v260 = vld [vmem:[%s248 + $0xc] sm:$0xf]
        %v261 = vld [vmem:[%s248 + $0x10] sm:$0xf]
        %v262 = vld [vmem:[%s248 + $0x14] sm:$0xf]
        %v263 = vld [vmem:[%s248 + $0x18] sm:$0xf]
        %v264 = vld [vmem:[%s248 + $0x1c] sm:$0xf]
        %v265 = vld [vmem:[%s248 + $0x20] sm:$0xf]
        %v266 = vld [vmem:[%s248 + $0x24] sm:$0xf]
        %v267 = vld [vmem:[%s248 + $0x28] sm:$0xf]
        %v268 = vld [vmem:[%s248 + $0x2c] sm:$0xf]
        %v269 = vld [vmem:[%s248 + $0x30] sm:$0xf]
        %v270 = vld [vmem:[%s248 + $0x34] sm:$0xf]
        %v271 = vld [vmem:[%s248 + $0x38] sm:$0xf]
        %v272 = vld [vmem:[%s248 + $0x3c] sm:$0xf]
        %v273 = vld [vmem:[%s248 + $0x40] sm:$0xf]
        %v274 = vld [vmem:[%s248 + $0x44] sm:$0xf]
        %v275 = vld [vmem:[%s248 + $0x48] sm:$0xf]
        %v276 = vld [vmem:[%s248 + $0x4c] sm:$0xf]
        %v277 = vld [vmem:[%s248 + $0x50] sm:$0xf]
        %v278 = vld [vmem:[%s248 + $0x54] sm:$0xf]
        %v279 = vld [vmem:[%s248 + $0x58] sm:$0xf]
        %v280 = vld [vmem:[%s248 + $0x5c] sm:$0xf]
        %v281 = vld [vmem:[%s248 + $0x60] sm:$0xf]
        %v282 = vld [vmem:[%s248 + $0x64] sm:$0xf]
        %v283 = vld [vmem:[%s248 + $0x68] sm:$0xf]
        %v284 = vld [vmem:[%s248 + $0x6c] sm:$0xf]
        %v285 = vld [vmem:[%s248 + $0x70] sm:$0xf]
        %v286 = vld [vmem:[%s248 + $0x74] sm:$0xf]
        %v287 = vld [vmem:[%s248 + $0x78] sm:$0xf]
        %v288 = vld [vmem:[%s248 + $0x7c] sm:$0xf]
        %v289 = vld [vmem:[%s1] sm:$0xf]
        %v290 = vld [vmem:[%s1 + $0x4] sm:$0xf]
        %v291 = vld [vmem:[%s1 + $0x8] sm:$0xf]
        %v292 = vld [vmem:[%s1 + $0xc] sm:$0xf]
        %v293 = vld [vmem:[%s1 + $0x10] sm:$0xf]
        %v294 = vld [vmem:[%s1 + $0x14] sm:$0xf]
        %v295 = vld [vmem:[%s1 + $0x18] sm:$0xf]
        %v296 = vld [vmem:[%s1 + $0x1c] sm:$0xf]
        %v297 = vld [vmem:[%s1 + $0x20] sm:$0xf]
        %v298 = vld [vmem:[%s1 + $0x24] sm:$0xf]
        %v299 = vld [vmem:[%s1 + $0x28] sm:$0x1]
        %v300 = vld [vmem:[%s2] sm:$0x1]
        %v302 = vlaneseq
        %v303 = vshrl.u32 %v302, 7
        %v304 = vsub.s32 0, %v303
        %v305 = vrot.slane %v300, %v304
        %v339 = vunpack.c.l.b16 %v257
        %v340 = vunpack.c.l.b16 %v258
        %v341 = vunpack.c.l.b16 %v259
        %v342 = vunpack.c.l.b16 %v260
        %v343 = vunpack.c.l.b16 %v261
        %v344 = vunpack.c.l.b16 %v262
        %v345 = vunpack.c.l.b16 %v263
        %v346 = vunpack.c.l.b16 %v264
        %v347 = vunpack.c.l.b16 %v265
        %v348 = vunpack.c.l.b16 %v266
        %v349 = vunpack.c.l.b16 %v267
        %v350 = vunpack.c.l.b16 %v268
        %v351 = vunpack.c.l.b16 %v269
        %v352 = vunpack.c.l.b16 %v270
        %v353 = vunpack.c.l.b16 %v271
        %v354 = vunpack.c.l.b16 %v272
        %v355 = vunpack.c.l.b16 %v273
        %v356 = vunpack.c.l.b16 %v274
        %v357 = vunpack.c.l.b16 %v275
        %v358 = vunpack.c.l.b16 %v276
        %v359 = vunpack.c.l.b16 %v277
        %v360 = vunpack.c.l.b16 %v278
        %v361 = vunpack.c.l.b16 %v279
        %v362 = vunpack.c.l.b16 %v280
        %v363 = vunpack.c.l.b16 %v281
        %v364 = vunpack.c.l.b16 %v282
        %v365 = vunpack.c.l.b16 %v283
        %v366 = vunpack.c.l.b16 %v284
        %v367 = vunpack.c.l.b16 %v285
        %v368 = vunpack.c.l.b16 %v286
        %v369 = vunpack.c.l.b16 %v287
        %v370 = vunpack.c.l.b16 %v288
        %v371 = vpack.c.b16 %v340, %v339
        %v372 = vpack.c.b16 %v342, %v341
        %v373 = vpack.c.b16 %v344, %v343
        %v374 = vpack.c.b16 %v346, %v345
        %v375 = vpack.c.b16 %v348, %v347
        %v376 = vpack.c.b16 %v350, %v349
        %v377 = vpack.c.b16 %v352, %v351
        %v378 = vpack.c.b16 %v354, %v353
        %v379 = vpack.c.b16 %v356, %v355
        %v380 = vpack.c.b16 %v358, %v357
        %v381 = vpack.c.b16 %v360, %v359
        %v382 = vpack.c.b16 %v362, %v361
        %v383 = vpack.c.b16 %v364, %v363
        %v384 = vpack.c.b16 %v366, %v365
        %v385 = vpack.c.b16 %v368, %v367
        %v386 = vpack.c.b16 %v370, %v369
        %v398 = vunpack.c.l.b16 %v289
        %v399 = vunpack.c.l.b16 %v290
        %v400 = vunpack.c.l.b16 %v291
        %v401 = vunpack.c.l.b16 %v292
        %v402 = vunpack.c.l.b16 %v293
        %v403 = vunpack.c.l.b16 %v294
        %v404 = vunpack.c.l.b16 %v295
        %v405 = vunpack.c.l.b16 %v296
        %v406 = vunpack.c.l.b16 %v297
        %v407 = vunpack.c.l.b16 %v298
        %v408 = vunpack.c.l.b16 %v299
        %v409 = vpack.c.b16 %v399, %v398
        %v410 = vpack.c.b16 %v401, %v400
        %v411 = vpack.c.b16 %v403, %v402
        %v412 = vpack.c.b16 %v405, %v404
        %v413 = vpack.c.b16 %v407, %v406
        %v414 = vpack.c.b16 %v408, %v408
        %vm420 = vcmask 662528
        %v422 = vsel %vm420, %v371, 0
        %v425 = vsel %vm420, %v372, 0
        %v428 = vsel %vm420, %v373, 0
        %v431 = vsel %vm420, %v374, 0
        %v434 = vsel %vm420, %v375, 0
        %v437 = vsel %vm420, %v376, 0
        %v440 = vsel %vm420, %v377, 0
        %v443 = vsel %vm420, %v378, 0
        %v446 = vsel %vm420, %v379, 0
        %v449 = vsel %vm420, %v380, 0
        %v452 = vsel %vm420, %v381, 0
        %v455 = vsel %vm420, %v382, 0
        %v458 = vsel %vm420, %v383, 0
        %v461 = vsel %vm420, %v384, 0
        %v464 = vsel %vm420, %v385, 0
        %v467 = vsel %vm420, %v386, 0
        %vm469 = vcmask 1040384
        %v470 = vsel 0, 4294967295, 65535
        %v471 = vsel %vm469, %v470, 0
        %v473 = vand.u32 %v414, %v471
        %475 = vmatprep.subr.bf16.mxu0 0
        %476 = vmatpush1.bf16.msra.mxu0 0
        %477 = vmatprep.subr.bf16.mxu0 0
        %478 = vmatpush1.bf16.msra.mxu0 0
        %479 = vmatprep.subr.bf16.mxu0 0
        %480 = vmatpush1.bf16.msra.mxu0 %v473
        %481 = vmatprep.subr.bf16.mxu0 0
        %482 = vmatpush1.bf16.msra.mxu0 %v413
        %483 = vmatprep.subr.bf16.mxu0 0
        %484 = vmatpush1.bf16.msra.mxu0 %v412
        %485 = vmatprep.subr.bf16.mxu0 0
        %486 = vmatpush1.bf16.msra.mxu0 %v411
        %487 = vmatprep.subr.bf16.mxu0 0
        %488 = vmatpush1.bf16.msra.mxu0 %v410
        %489 = vmatprep.subr.bf16.mxu0 0
        %490 = vmatpush1.bf16.msra.mxu0 %v409
        %491 = vmatprep.subr.bf16.mxu0 0
        %492 = vmatpush2.bf16.msra.mxu0 0
        %493 = vmatprep.subr.bf16.mxu0 0
        %494 = vmatpush2.bf16.msra.mxu0 0
        %495 = vmatprep.subr.bf16.mxu0 0
        %496 = vmatpush2.bf16.msra.mxu0 0
        %497 = vmatprep.subr.bf16.mxu0 0
        %498 = vmatpush2.bf16.msra.mxu0 0
        %499 = vmatprep.subr.bf16.mxu0 0
        %500 = vmatpush2.bf16.msra.mxu0 0
        %501 = vmatprep.subr.bf16.mxu0 0
        %502 = vmatpush2.bf16.msra.mxu0 0
        %503 = vmatprep.subr.bf16.mxu0 0
        %504 = vmatpush2.bf16.msra.mxu0 0
        %505 = vmatprep.subr.bf16.mxu0 0
        %506 = vmatpush2.bf16.msra.mxu0 0
        %507 = vmatprep.mubr.bf16.mxu0 0
        %508 = vmatmul.mubr.bf16.gmra.mxu0 %v422
        %v509 = vpop.f32.mrf.mxu0
        %v510 = vadd.f32 %v305, %v509
        %v511 = vpop.f32.mrf.mxu0
        %v512 = vpop.f32.mrf.mxu0
        %v513 = vadd.f32 %v305, %v512
        %v514 = vpop.f32.mrf.mxu0
        %515 = vmatprep.mubr.bf16.mxu0 0
        %516 = vmatmul.mubr.bf16.gmra.mxu0 %v425
        %v517 = vpop.f32.mrf.mxu0
        %v518 = vadd.f32 %v305, %v517
        %v519 = vpop.f32.mrf.mxu0
        %v520 = vpop.f32.mrf.mxu0
        %v521 = vadd.f32 %v305, %v520
        %v522 = vpop.f32.mrf.mxu0
        %523 = vmatprep.mubr.bf16.mxu0 0
        %524 = vmatmul.mubr.bf16.gmra.mxu0 %v428
        %v525 = vpop.f32.mrf.mxu0
        %v526 = vadd.f32 %v305, %v525
        %v527 = vpop.f32.mrf.mxu0
        %v528 = vpop.f32.mrf.mxu0
        %v529 = vadd.f32 %v305, %v528
        %v530 = vpop.f32.mrf.mxu0
        %531 = vmatprep.mubr.bf16.mxu0 0
        %532 = vmatmul.mubr.bf16.gmra.mxu0 %v431
        %v533 = vpop.f32.mrf.mxu0
        %v534 = vadd.f32 %v305, %v533
        %v535 = vpop.f32.mrf.mxu0
        %v536 = vpop.f32.mrf.mxu0
        %v537 = vadd.f32 %v305, %v536
        %v538 = vpop.f32.mrf.mxu0
        %539 = vmatprep.mubr.bf16.mxu0 0
        %540 = vmatmul.mubr.bf16.gmra.mxu0 %v434
        %v541 = vpop.f32.mrf.mxu0
        %v542 = vadd.f32 %v305, %v541
        %v543 = vpop.f32.mrf.mxu0
        %v544 = vpop.f32.mrf.mxu0
        %v545 = vadd.f32 %v305, %v544
        %v546 = vpop.f32.mrf.mxu0
        %547 = vmatprep.mubr.bf16.mxu0 0
        %548 = vmatmul.mubr.bf16.gmra.mxu0 %v437
        %v549 = vpop.f32.mrf.mxu0
        %v550 = vadd.f32 %v305, %v549
        %v551 = vpop.f32.mrf.mxu0
        %v552 = vpop.f32.mrf.mxu0
        %v553 = vadd.f32 %v305, %v552
        %v554 = vpop.f32.mrf.mxu0
        %555 = vmatprep.mubr.bf16.mxu0 0
        %556 = vmatmul.mubr.bf16.gmra.mxu0 %v440
        %v557 = vpop.f32.mrf.mxu0
        %v558 = vadd.f32 %v305, %v557
        %v559 = vpop.f32.mrf.mxu0
        %v560 = vpop.f32.mrf.mxu0
        %v561 = vadd.f32 %v305, %v560
        %v562 = vpop.f32.mrf.mxu0
        %563 = vmatprep.mubr.bf16.mxu0 0
        %564 = vmatmul.mubr.bf16.gmra.mxu0 %v443
        %v565 = vpop.f32.mrf.mxu0
        %v566 = vadd.f32 %v305, %v565
        %v567 = vpop.f32.mrf.mxu0
        %v568 = vpop.f32.mrf.mxu0
        %v569 = vadd.f32 %v305, %v568
        %v570 = vpop.f32.mrf.mxu0
        %571 = vmatprep.mubr.bf16.mxu0 0
        %572 = vmatmul.mubr.bf16.gmra.mxu0 %v446
        %v573 = vpop.f32.mrf.mxu0
        %v574 = vadd.f32 %v305, %v573
        %v575 = vpop.f32.mrf.mxu0
        %v576 = vpop.f32.mrf.mxu0
        %v577 = vadd.f32 %v305, %v576
        %v578 = vpop.f32.mrf.mxu0
        %579 = vmatprep.mubr.bf16.mxu0 0
        %580 = vmatmul.mubr.bf16.gmra.mxu0 %v449
        %v581 = vpop.f32.mrf.mxu0
        %v582 = vadd.f32 %v305, %v581
        %v583 = vpop.f32.mrf.mxu0
        %v584 = vpop.f32.mrf.mxu0
        %v585 = vadd.f32 %v305, %v584
        %v586 = vpop.f32.mrf.mxu0
        %587 = vmatprep.mubr.bf16.mxu0 0
        %588 = vmatmul.mubr.bf16.gmra.mxu0 %v452
        %v589 = vpop.f32.mrf.mxu0
        %v590 = vadd.f32 %v305, %v589
        %v591 = vpop.f32.mrf.mxu0
        %v592 = vpop.f32.mrf.mxu0
        %v593 = vadd.f32 %v305, %v592
        %v594 = vpop.f32.mrf.mxu0
        %595 = vmatprep.mubr.bf16.mxu0 0
        %596 = vmatmul.mubr.bf16.gmra.mxu0 %v455
        %v597 = vpop.f32.mrf.mxu0
        %v598 = vadd.f32 %v305, %v597
        %v599 = vpop.f32.mrf.mxu0
        %v600 = vpop.f32.mrf.mxu0
        %v601 = vadd.f32 %v305, %v600
        %v602 = vpop.f32.mrf.mxu0
        %603 = vmatprep.mubr.bf16.mxu0 0
        %604 = vmatmul.mubr.bf16.gmra.mxu0 %v458
        %v605 = vpop.f32.mrf.mxu0
        %v606 = vadd.f32 %v305, %v605
        %v607 = vpop.f32.mrf.mxu0
        %v608 = vpop.f32.mrf.mxu0
        %v609 = vadd.f32 %v305, %v608
        %v610 = vpop.f32.mrf.mxu0
        %611 = vmatprep.mubr.bf16.mxu0 0
        %612 = vmatmul.mubr.bf16.gmra.mxu0 %v461
        %v613 = vpop.f32.mrf.mxu0
        %v614 = vadd.f32 %v305, %v613
        %v615 = vpop.f32.mrf.mxu0
        %v616 = vpop.f32.mrf.mxu0
        %v617 = vadd.f32 %v305, %v616
        %v618 = vpop.f32.mrf.mxu0
        %619 = vmatprep.mubr.bf16.mxu0 0
        %620 = vmatmul.mubr.bf16.gmra.mxu0 %v464
        %v621 = vpop.f32.mrf.mxu0
        %v622 = vadd.f32 %v305, %v621
        %v623 = vpop.f32.mrf.mxu0
        %v624 = vpop.f32.mrf.mxu0
        %v625 = vadd.f32 %v305, %v624
        %v626 = vpop.f32.mrf.mxu0
        %627 = vmatprep.mubr.bf16.mxu0 0
        %628 = vmatmul.mubr.bf16.gmra.mxu0 %v467
        %v629 = vpop.f32.mrf.mxu0
        %v630 = vadd.f32 %v305, %v629
        %v631 = vpop.f32.mrf.mxu0
        %v632 = vpop.f32.mrf.mxu0
        %v633 = vadd.f32 %v305, %v632
        %v634 = vpop.f32.mrf.mxu0
        %635 = vdwg.mxu0
        %v636 = vmax.f32 %v510, 0.0
        %v637 = vmax.f32 %v513, 0.0
        %v638 = vmax.f32 %v518, 0.0
        %v639 = vmax.f32 %v521, 0.0
        %v640 = vmax.f32 %v526, 0.0
        %v641 = vmax.f32 %v529, 0.0
        %v642 = vmax.f32 %v534, 0.0
        %v643 = vmax.f32 %v537, 0.0
        %v644 = vmax.f32 %v542, 0.0
        %v645 = vmax.f32 %v545, 0.0
        %v646 = vmax.f32 %v550, 0.0
        %v647 = vmax.f32 %v553, 0.0
        %v648 = vmax.f32 %v558, 0.0
        %v649 = vmax.f32 %v561, 0.0
        %v650 = vmax.f32 %v566, 0.0
        %v651 = vmax.f32 %v569, 0.0
        %v652 = vmax.f32 %v574, 0.0
        %v653 = vmax.f32 %v577, 0.0
        %v654 = vmax.f32 %v582, 0.0
        %v655 = vmax.f32 %v585, 0.0
        %v656 = vmax.f32 %v590, 0.0
        %v657 = vmax.f32 %v593, 0.0
        %v658 = vmax.f32 %v598, 0.0
        %v659 = vmax.f32 %v601, 0.0
        %v660 = vmax.f32 %v606, 0.0
        %v661 = vmax.f32 %v609, 0.0
        %v662 = vmax.f32 %v614, 0.0
        %v663 = vmax.f32 %v617, 0.0
        %v664 = vmax.f32 %v622, 0.0
        %v665 = vmax.f32 %v625, 0.0
        %v666 = vmax.f32 %v630, 0.0
        %v667 = vmax.f32 %v633, 0.0
        %v668 = vld [vmem:[#allocation2] sm:$0x1]
        %vm669 = vcmask 261120
        %v670 = vsel %vm669, %v636, 0.0
        %v671 = vsel %vm669, %v637, 0.0
        %v672 = vadd.f32 %v670, %v671
        %v673 = vsel %vm669, %v638, 0.0
        %v674 = vadd.f32 %v672, %v673
        %v675 = vsel %vm669, %v639, 0.0
        %v676 = vadd.f32 %v674, %v675
        %v677 = vsel %vm669, %v640, 0.0
        %v678 = vadd.f32 %v676, %v677
        %v679 = vsel %vm669, %v641, 0.0
        %v680 = vadd.f32 %v678, %v679
        %v681 = vsel %vm669, %v642, 0.0
        %v682 = vadd.f32 %v680, %v681
        %v683 = vsel %vm669, %v643, 0.0
        %v684 = vadd.f32 %v682, %v683
        %v685 = vsel %vm669, %v644, 0.0
        %v686 = vadd.f32 %v684, %v685
        %v687 = vsel %vm669, %v645, 0.0
        %v688 = vadd.f32 %v686, %v687
        %v689 = vsel %vm669, %v646, 0.0
        %v690 = vadd.f32 %v688, %v689
        %v691 = vsel %vm669, %v647, 0.0
        %v692 = vadd.f32 %v690, %v691
        %v693 = vsel %vm669, %v648, 0.0
        %v694 = vadd.f32 %v692, %v693
        %v695 = vsel %vm669, %v649, 0.0
        %v696 = vadd.f32 %v694, %v695
        %v697 = vsel %vm669, %v650, 0.0
        %v698 = vadd.f32 %v696, %v697
        %v699 = vsel %vm669, %v651, 0.0
        %v700 = vadd.f32 %v698, %v699
        %v701 = vsel %vm669, %v652, 0.0
        %v702 = vadd.f32 %v700, %v701
        %v703 = vsel %vm669, %v653, 0.0
        %v704 = vadd.f32 %v702, %v703
        %v705 = vsel %vm669, %v654, 0.0
        %v706 = vadd.f32 %v704, %v705
        %v707 = vsel %vm669, %v655, 0.0
        %v708 = vadd.f32 %v706, %v707
        %v709 = vsel %vm669, %v656, 0.0
        %v710 = vadd.f32 %v708, %v709
        %v711 = vsel %vm669, %v657, 0.0
        %v712 = vadd.f32 %v710, %v711
        %v713 = vsel %vm669, %v658, 0.0
        %v714 = vadd.f32 %v712, %v713
        %v715 = vsel %vm669, %v659, 0.0
        %v716 = vadd.f32 %v714, %v715
        %v717 = vsel %vm669, %v660, 0.0
        %v718 = vadd.f32 %v716, %v717
        %v719 = vsel %vm669, %v661, 0.0
        %v720 = vadd.f32 %v718, %v719
        %v721 = vsel %vm669, %v662, 0.0
        %v722 = vadd.f32 %v720, %v721
        %v723 = vsel %vm669, %v663, 0.0
        %v724 = vadd.f32 %v722, %v723
        %v725 = vsel %vm669, %v664, 0.0
        %v726 = vadd.f32 %v724, %v725
        %v727 = vsel %vm669, %v665, 0.0
        %v728 = vadd.f32 %v726, %v727
        %v729 = vsel %vm669, %v666, 0.0
        %v730 = vadd.f32 %v728, %v729
        %v731 = vsel %vm669, %v667, 0.0
        %v732 = vadd.f32 %v730, %v731
        %v733 = vrot.slane %v732, 4
        %v734 = vadd.f32 %v732, %v733
        %v735 = vrot.slane %v734, 2
        %v736 = vadd.f32 %v734, %v735
        %v737 = vrot.slane %v736, 1
        %v738 = vadd.f32 %v736, %v737
        %v739 = vadd.f32 %v668, %v738
        %vm740 = vcmask 253952
        %741 = vst.msk [vmem:[#allocation2] sm:$0x1] %vm740, %v739
        // Predicated region
        $region45: #{general_model_forward.1} parent=39 // pred_check
          %p742 = pneg %p251
        $region46: #{general_model_forward.1} parent=39 // pred_check_branch
          %744 = sbr.rel (%p742) target = $region48
        $region47: #{general_model_forward.1} parent=39 // pred_region
          %v745 = vld [vmem:[#allocation2] sm:$0x1]
          %v746 = vmul.f32 %v745, 0.00390625
          %v747 = vld [vmem:[%s3] sm:$0xff]
          %v748 = vld [vmem:[%s3 + $0x8] sm:$0xff]
          %v749 = vld [vmem:[%s3 + $0x10] sm:$0xff]
          %v750 = vld [vmem:[%s3 + $0x18] sm:$0xff]
          %v751 = vld [vmem:[%s4] sm:$0x1]
          %v753 = vsel %vm669, %v746, 0
          %755 = vmatprep.subr.mxu0 0.0
          %756 = vmatpush1.msra.mxu0 0.0
          %757 = vmatprep.subr.mxu0 0.0
          %758 = vmatpush1.msra.mxu0 0.0
          %759 = vmatprep.subr.mxu0 0.0
          %760 = vmatpush1.msra.mxu0 0.0
          %761 = vmatprep.subr.mxu0 0.0
          %762 = vmatpush1.msra.mxu0 0.0
          %763 = vmatprep.subr.mxu0 0.0
          %764 = vmatpush1.msra.mxu0 0.0
          %765 = vmatprep.subr.mxu0 0.0
          %766 = vmatpush1.msra.mxu0 0.0
          %767 = vmatprep.subr.mxu0 0.0
          %768 = vmatpush1.msra.mxu0 0.0
          %769 = vmatprep.subr.mxu0 0.0
          %770 = vmatpush1.msra.mxu0 0.0
          %771 = vmatprep.subr.mxu0 0.0
          %772 = vmatpush1.msra.mxu0 0.0
          %773 = vmatprep.subr.mxu0 0.0
          %774 = vmatpush1.msra.mxu0 0.0
          %775 = vmatprep.subr.mxu0 0.0
          %776 = vmatpush1.msra.mxu0 0.0
          %777 = vmatprep.subr.mxu0 0.0
          %778 = vmatpush1.msra.mxu0 0.0
          %779 = vmatprep.subr.mxu0 0.0
          %780 = vmatpush1.msra.mxu0 %v750
          %781 = vmatprep.subr.mxu0 0.0
          %782 = vmatpush1.msra.mxu0 %v749
          %783 = vmatprep.subr.mxu0 0.0
          %784 = vmatpush1.msra.mxu0 %v748
          %785 = vmatprep.subr.mxu0 0.0
          %786 = vmatpush1.msra.mxu0 %v747
          %787 = vmatprep.subr.mxu0 0.0
          %788 = vmatpush2.msra.mxu0 0.0
          %789 = vmatprep.subr.mxu0 0.0
          %790 = vmatpush2.msra.mxu0 0.0
          %791 = vmatprep.subr.mxu0 0.0
          %792 = vmatpush2.msra.mxu0 0.0
          %793 = vmatprep.subr.mxu0 0.0
          %794 = vmatpush2.msra.mxu0 0.0
          %795 = vmatprep.subr.mxu0 0.0
          %796 = vmatpush2.msra.mxu0 0.0
          %797 = vmatprep.subr.mxu0 0.0
          %798 = vmatpush2.msra.mxu0 0.0
          %799 = vmatprep.subr.mxu0 0.0
          %800 = vmatpush2.msra.mxu0 0.0
          %801 = vmatprep.subr.mxu0 0.0
          %802 = vmatpush2.msra.mxu0 0.0
          %803 = vmatprep.subr.mxu0 0.0
          %804 = vmatpush2.msra.mxu0 0.0
          %805 = vmatprep.subr.mxu0 0.0
          %806 = vmatpush2.msra.mxu0 0.0
          %807 = vmatprep.subr.mxu0 0.0
          %808 = vmatpush2.msra.mxu0 0.0
          %809 = vmatprep.subr.mxu0 0.0
          %810 = vmatpush2.msra.mxu0 0.0
          %811 = vmatprep.subr.mxu0 0.0
          %812 = vmatpush2.msra.mxu0 0.0
          %813 = vmatprep.subr.mxu0 0.0
          %814 = vmatpush2.msra.mxu0 0.0
          %815 = vmatprep.subr.mxu0 0.0
          %816 = vmatpush2.msra.mxu0 0.0
          %817 = vmatprep.subr.mxu0 0.0
          %818 = vmatpush2.msra.mxu0 0.0
          %819 = vmatprep.mubr.f32.mxu0 0.0
          %820 = vmatmul.mubr.f32.gmra.mxu0 %v753
          %v821 = vpop.f32.mrf.mxu0
          %v822 = vadd.f32 %v751, %v821
          %v823 = vpop.f32.mrf.mxu0
          %824 = vdwg.mxu0
          %825 = vst [vmem:[%s239] sm:$0x1] %v822
        $region48: #{general_model_forward.1} parent=39 // pred_fallthru
          _
        %s826 = sand.u32 %s151, 1
        %s827 = scalar_lea.sflag [#allocation4], %s826
        %s828 = sand.u32 %s151, 1
        %s829 = scalar_lea.vmem [#allocation3], %s828
        // Predicated region
        $region49: #{general_model_forward.1} parent=39 // pred_check
          %p830 = pneg %p161
        $region50: #{general_model_forward.1} parent=39 // pred_check_branch
          %832 = sbr.rel (%p830) target = $region52
        $region51: #{general_model_forward.1} parent=39 // pred_region
          %s834 = ssub.s32 16, 16
          %835 = vsyncadd %s827, %s834
          %s836 = smul.addr %s23, 16
          %s837 = scalar_lea.hbm %s5, %s836
          %s839 = sshll.u32 %s829, 4
          %s840 = int_to_ptr.vmem [resolvable:$true] %s839
          %842 = dma.vmem_to_hbm [thread:$0]  %s840, 16, %s837, %s827
        $region52: #{general_model_forward.1} parent=39 // pred_fallthru
          _
      $region40: #{general_model_forward.1} parent=5 // pred_fallthru
        _
      %p843 = scmp.le.s32.totalorder 2, %s14
      // Predicated region
      $region53: #{general_model_forward.1} parent=5 // pred_check
        %p844 = pneg %p843
      $region54: #{general_model_forward.1} parent=5 // pred_check_branch
        %846 = sbr.rel (%p844) target = $region56
      $region55: #{general_model_forward.1} parent=5 // pred_region
        %s847 = ssub.s32 %s14, 2
        // Predicated region
        $region57: #{general_model_forward.1} parent=55 // pred_check
          %p848 = pneg %p167
        $region58: #{general_model_forward.1} parent=55 // pred_check_branch
          %850 = sbr.rel (%p848) target = $region60
        $region59: #{general_model_forward.1} parent=55 // pred_region
          %s851 = sand.u32 %s152, 1
          %s852 = scalar_lea.sflag [#allocation4], %s851
          %s853 = sand.u32 %s152, 1
          %s854 = scalar_lea.vmem [#allocation3], %s853
          %855 = dma.done %s852, 16
        $region60: #{general_model_forward.1} parent=55 // pred_fallthru
          _
      $region56: #{general_model_forward.1} parent=5 // pred_fallthru
        _
    $region6: #{general_model_forward.1} parent=1 // loop_footer
      %s18 = sadd.s32 1, %s14
    $region7: #{general_model_forward.1} parent=1 // loop_footer_branch
      %13 = sbr.rel target = $region3
    $region8: #{general_model_forward.1} parent=1 // loop_exit
      _
    %856 = vsyncpa [#allocation4], 1
    %s857 = scalar_lea.sflag [#allocation4], 1
    %858 = vsyncpa %s857, 1

</llo_original>
